<compile_context>
chip_gen: v5e
topology: v5e:2x2
jax: 0.10.0
libtpu: 0.0.40
codegen_flags: <defaults>
</compile_context>

<pallas_src>
import functools

import jax
import jax.numpy as jnp
from jax.experimental import pallas as pl
from jax.experimental.pallas import tpu as pltpu


_NEG_FILL = -1.0e4  # pad value for x; exp((_NEG_FILL - 1) / T) == 0 in f32


def _egonce_kernel(xr_ref, xc_ref, m_ref, rows_i_ref, rows_j_ref, *,
                   inv_temp: float, n_valid: int):
    tm, np_ = xr_ref.shape
    i0 = pl.program_id(0) * tm            # first global row handled by this block

    # Combined (mask_v*mask_n + eye) > 0 row block, pre-computed in the wrapper
    # as int8: 1 byte/elem of HBM read instead of 8.
    maskf = m_ref[...].astype(jnp.float32)                         # (tm, Np)

    # ---- i-term: softmax over rows of x (lane reductions) -----------------
    # Single shifted exp: x is a cosine similarity in [-1, 1] (clamped above at
    # 1 for robustness), so (x - 1)/T <= 0 and exp never overflows; the shift
    # cancels in the log-difference below.  Padded columns hold _NEG_FILL and
    # flush to exactly 0.
    e_row = jnp.exp((jnp.minimum(xr_ref[...], 1.0) - 1.0) * inv_temp)
    den_i = jnp.sum(e_row, axis=1, keepdims=True)                  # (tm, 1)
    num_i = jnp.sum(e_row * maskf, axis=1, keepdims=True)          # (tm, 1)
    row_id = i0 + jax.lax.broadcasted_iota(jnp.int32, (tm, 1), 0)
    # Padded rows give log(0)-log(0) = nan; select them away before any sum.
    rows_i_ref[...] = jnp.where(row_id < n_valid,
                                jnp.log(num_i) - jnp.log(den_i), 0.0)
    # e_row is dead here, before the j-term exp tile goes live.

    # ---- j-term: softmax over rows of x.T, with no transpose --------------
    # e_col[k, t] = exp((x[k, i0+t] - 1)/T).  den_j is a sublane reduction.
    # num_j[t] = sum_k maskf[t, k] * e_col[k, t] is the diagonal of
    # maskf @ e_col, computed on the otherwise-idle MXU (free on v6e/v7x; the
    # tm <= 256 cap keeps it cheap on v5e).
    e_col = jnp.exp((jnp.minimum(xc_ref[...], 1.0) - 1.0) * inv_temp)  # (Np, tm)
    den_j = jnp.sum(e_col, axis=0, keepdims=True)                  # (1, tm)
    p = jnp.dot(maskf, e_col, preferred_element_type=jnp.float32)  # (tm, tm)
    diag = (jax.lax.broadcasted_iota(jnp.int32, (tm, tm), 0) ==
            jax.lax.broadcasted_iota(jnp.int32, (tm, tm), 1))
    num_j = jnp.sum(jnp.where(diag, p, 0.0), axis=0, keepdims=True)  # (1, tm)
    col_id = i0 + jax.lax.broadcasted_iota(jnp.int32, (1, tm), 1)
    rows_j_ref[...] = jnp.where(col_id < n_valid,
                                jnp.log(num_j) - jnp.log(den_j), 0.0)


def _choose_tile(np_: int):
    """Row-tile size and scoped-VMEM limit derived from the chip's real VMEM."""
    try:
        cap = int(pltpu.get_tpu_info().vmem_capacity_bytes)
    except Exception:  # interpret mode / very old runtimes
        cap = 128 * 1024 * 1024
    budget = min(48 * 1024 * 1024, cap // 2 - 4 * 1024 * 1024)
    # ~32 B of VMEM per x element at row-tile tm: double-buffered inputs
    # (4 + 4 + 1) B/elem * 2 = 18, plus ~14 B/elem of live f32 temporaries
    # (maskf + one exp tile + a fused product).
    per_elem = 32
    tm = 0
    for cand in (256, 128):   # 256 cap: v5e MXU cost + >= 1 KiB column-slab runs
        if np_ % cand == 0 and per_elem * cand * np_ <= budget:
            tm = cand
            break
    if tm == 0:
        # TODO(synk): add a second (column) tiling level with per-row num/den
        # accumulators for very large N instead of refusing.
        raise ValueError(
            f"EgoNCE Pallas kernel: padded N={np_} too large for single-level "
            f"row tiling within the {budget // (1024 * 1024)} MiB VMEM budget")
    if np_ // tm < 2 and tm > 128:
        tm = 128   # v7x: keep >= 2 parallel row blocks so both TensorCores work
    vmem_limit = min(cap, budget + 16 * 1024 * 1024)
    return tm, vmem_limit


def egonce(x, mask_v, mask_n, temperature=0.05, noun=True, verb=True):
    """Pallas implementation of EgoNCE.forward.

    Returns (loss, mask_bool, temperature) mirroring the PyTorch module.
    Assumes x is a cosine-similarity matrix with entries in [-1, 1].
    """
    n, m = x.shape
    assert n == m, "EgoNCE adds eye(N) to the mask -> x must be square"

    x = x.astype(jnp.float32)                     # no-op if already f32
    if noun and verb:
        pre = mask_v.astype(jnp.float32) * mask_n.astype(jnp.float32)
    elif noun:
        pre = mask_n.astype(jnp.float32)
    else:
        pre = mask_v.astype(jnp.float32)
    # Same add-eye-then-threshold as the reference; XLA fuses the iota-based
    # eye into a single elementwise pass producing the lane-dense int8 mask.
    mask_c = ((pre + jnp.eye(n, dtype=jnp.float32)) > 0).astype(jnp.int8)

    np_ = max(128, pl.cdiv(n, 128) * 128)         # lane-dense padded width
    pad = np_ - n
    if pad:   # only materialise padded copies when N is not already aligned
        xp = jnp.pad(x, ((0, pad), (0, pad)), constant_values=_NEG_FILL)
        mp = jnp.pad(mask_c, ((0, pad), (0, pad)))
    else:
        xp, mp = x, mask_c

    tm, vmem_limit = _choose_tile(np_)
    grid = (np_ // tm,)

    kernel = functools.partial(
        _egonce_kernel,
        inv_temp=float(1.0 / temperature),
        n_valid=int(n),
    )

    cost = pl.CostEstimate(
        flops=2 * tm * np_ * np_ + 8 * np_ * np_,   # diag-matmul + elementwise
        transcendentals=2 * np_ * np_,              # exp on row + column slabs
        bytes_accessed=9 * np_ * np_,               # 2 f32 x reads + 1 i8 mask
    )

    rows_i, rows_j = pl.pallas_call(
        kernel,
        grid=grid,
        out_shape=(
            jax.ShapeDtypeStruct((np_, 1), jnp.float32),  # i-term per row
            jax.ShapeDtypeStruct((1, np_), jnp.float32),  # j-term per row (lane-dense)
        ),
        in_specs=[
            pl.BlockSpec((tm, np_), lambda i: (i, 0)),    # x row block
            pl.BlockSpec((np_, tm), lambda i: (0, i)),    # x column slab
            pl.BlockSpec((tm, np_), lambda i: (i, 0)),    # combined int8 mask
        ],
        out_specs=(
            pl.BlockSpec((tm, 1), lambda i: (i, 0)),
            pl.BlockSpec((1, tm), lambda i: (0, i)),
        ),
        compiler_params=pltpu.CompilerParams(
            dimension_semantics=("parallel",),
            vmem_limit_bytes=int(vmem_limit),
        ),
        cost_estimate=cost,
    )(xp, xp, mp)

    loss = -(jnp.sum(rows_i) + jnp.sum(rows_j)) / n      # -(loss_i + loss_j)
    return loss, mask_c.astype(jnp.bool_), temperature


def _egonce_ref(x, mask_v, mask_n, temperature=0.05, noun=True, verb=True):
    """Pure-JAX reference mirroring the PyTorch module (for validation)."""
    n = x.shape[0]
    eye = jnp.eye(n, dtype=jnp.float32)
    if noun and verb:
        mask = mask_v * mask_n + eye
    elif noun:
        mask = mask_n + eye
    else:
        mask = mask_v + eye
    mask_bool = mask > 0
    i_sm = jax.nn.softmax(x / temperature, axis=1)
    j_sm = jax.nn.softmax(x.T / temperature, axis=1)
    idiag = jnp.log(jnp.sum(i_sm * mask_bool, axis=1))
    jdiag = jnp.log(jnp.sum(j_sm * mask_bool, axis=1))
    return -(idiag.mean()) - (jdiag.mean()), mask_bool


if __name__ == "__main__":
    key = jax.random.PRNGKey(0)
    k1, k2, k3 = jax.random.split(key, 3)

    N = 8  # batch size (similarity matrix is N x N)
    x = jax.random.uniform(k1, (N, N), minval=-1.0, maxval=1.0,
                           dtype=jnp.float32)
    mask_v = (jax.random.uniform(k2, (N, N)) > 0.5).astype(jnp.float32)
    mask_n = (jax.random.uniform(k3, (N, N)) > 0.5).astype(jnp.float32)

    loss, mask_bool, temp = egonce(x, mask_v, mask_n,
                                   temperature=0.05, noun=True, verb=True)
    jax.block_until_ready((loss, mask_bool))

    loss_ref, mask_ref = _egonce_ref(x, mask_v, mask_n, 0.05, True, True)
    assert jnp.allclose(loss, loss_ref, rtol=2e-3, atol=2e-4), (loss, loss_ref)
    assert bool(jnp.all(mask_bool == mask_ref))
    print("KERNEL_OK")
</pallas_src>

<mosaic_0001>
module attributes {stable_mosaic.version = 11 : i64} {
  func.func @_egonce_kernel(%arg0: i32, %arg1: memref<128x128xf32, #tpu.memory_space<vmem>>, %arg2: memref<128x128xf32, #tpu.memory_space<vmem>>, %arg3: memref<128x128xi8, #tpu.memory_space<vmem>>, %arg4: memref<128x1xf32, #tpu.memory_space<vmem>>, %arg5: memref<1x128xf32, #tpu.memory_space<vmem>>) attributes {dimension_semantics = [#tpu.dimension_semantics<parallel>], iteration_bounds = array<i64: 1>, scalar_prefetch = 0 : i64, scratch_operands = 0 : i64, tpu.core_type = #tpu.core_type<tc>, window_params = [{transform_indices = @transform_0, window_bounds = array<i64: 128, 128>}, {transform_indices = @transform_1, window_bounds = array<i64: 128, 128>}, {transform_indices = @transform_2, window_bounds = array<i64: 128, 128>}, {transform_indices = @transform_3, window_bounds = array<i64: 128, 1>}, {transform_indices = @transform_4, window_bounds = array<i64: 1, 128>}]} {
    %c128_i32 = arith.constant 128 : i32
    %0 = arith.muli %arg0, %c128_i32 : i32
    %c0 = arith.constant 0 : index
    %c0_0 = arith.constant 0 : index
    %1 = vector.load %arg3[%c0, %c0_0] : memref<128x128xi8, #tpu.memory_space<vmem>>, vector<128x128xi8>
    %2 = arith.sitofp %1 : vector<128x128xi8> to vector<128x128xf32>
    %c0_1 = arith.constant 0 : index
    %c0_2 = arith.constant 0 : index
    %3 = vector.load %arg1[%c0_1, %c0_2] : memref<128x128xf32, #tpu.memory_space<vmem>>, vector<128x128xf32>
    %cst = arith.constant 1.000000e+00 : f32
    %4 = vector.broadcast %cst : f32 to vector<128x128xf32>
    %5 = arith.minimumf %3, %4 : vector<128x128xf32>
    %cst_3 = arith.constant 1.000000e+00 : f32
    %6 = vector.broadcast %cst_3 : f32 to vector<128x128xf32>
    %7 = arith.subf %5, %6 : vector<128x128xf32>
    %cst_4 = arith.constant 2.000000e+01 : f32
    %8 = vector.broadcast %cst_4 : f32 to vector<128x128xf32>
    %9 = arith.mulf %7, %8 : vector<128x128xf32>
    %10 = math.exp %9 : vector<128x128xf32>
    %cst_5 = arith.constant dense<0.000000e+00> : vector<128xf32>
    %11 = vector.multi_reduction <add>, %10, %cst_5 [1] : vector<128x128xf32> to vector<128xf32>
    %12 = vector.shape_cast %11 : vector<128xf32> to vector<128x1xf32>
    %13 = arith.mulf %10, %2 : vector<128x128xf32>
    %cst_6 = arith.constant dense<0.000000e+00> : vector<128xf32>
    %14 = vector.multi_reduction <add>, %13, %cst_6 [1] : vector<128x128xf32> to vector<128xf32>
    %15 = vector.shape_cast %14 : vector<128xf32> to vector<128x1xf32>
    %16 = tpu.iota {dimensions = array<i32: 0>} : vector<128x1xi32>
    %17 = vector.broadcast %0 : i32 to vector<128x1xi32>
    %18 = arith.addi %17, %16 : vector<128x1xi32>
    %c8_i32 = arith.constant 8 : i32
    %19 = vector.broadcast %c8_i32 : i32 to vector<128x1xi32>
    %20 = arith.cmpi slt, %18, %19 : vector<128x1xi32>
    %21 = math.log %15 : vector<128x1xf32>
    %22 = math.log %12 : vector<128x1xf32>
    %23 = arith.subf %21, %22 : vector<128x1xf32>
    %cst_7 = arith.constant 0.000000e+00 : f32
    %24 = vector.broadcast %cst_7 : f32 to vector<128x1xf32>
    %25 = arith.select %20, %23, %24 : vector<128x1xi1>, vector<128x1xf32>
    %c0_8 = arith.constant 0 : index
    %c0_9 = arith.constant 0 : index
    %26 = vector.load %arg4[%c0_8, %c0_9] : memref<128x1xf32, #tpu.memory_space<vmem>>, vector<128x1xf32>
    tpu.vector_store %arg4[%c0_8, %c0_9], %25 {strides = array<i32>} : memref<128x1xf32, #tpu.memory_space<vmem>>, vector<128x1xf32>,
    %c0_10 = arith.constant 0 : index
    %c0_11 = arith.constant 0 : index
    %27 = vector.load %arg2[%c0_10, %c0_11] : memref<128x128xf32, #tpu.memory_space<vmem>>, vector<128x128xf32>
    %cst_12 = arith.constant 1.000000e+00 : f32
    %28 = vector.broadcast %cst_12 : f32 to vector<128x128xf32>
    %29 = arith.minimumf %27, %28 : vector<128x128xf32>
    %cst_13 = arith.constant 1.000000e+00 : f32
    %30 = vector.broadcast %cst_13 : f32 to vector<128x128xf32>
    %31 = arith.subf %29, %30 : vector<128x128xf32>
    %cst_14 = arith.constant 2.000000e+01 : f32
    %32 = vector.broadcast %cst_14 : f32 to vector<128x128xf32>
    %33 = arith.mulf %31, %32 : vector<128x128xf32>
    %34 = math.exp %33 : vector<128x128xf32>
    %cst_15 = arith.constant dense<0.000000e+00> : vector<128xf32>
    %35 = vector.multi_reduction <add>, %34, %cst_15 [0] : vector<128x128xf32> to vector<128xf32>
    %36 = vector.shape_cast %35 : vector<128xf32> to vector<1x128xf32>
    %cst_16 = arith.constant dense<0.000000e+00> : vector<128x128xf32>
    %37 = tpu.matmul %2, %34, %cst_16 {dimension_numbers = #tpu.dot_dimension_numbers<[1], [0], [0], [1], [0, 0, 1, 1], [], []>} : vector<128x128xf32>, vector<128x128xf32>, vector<128x128xf32> -> vector<128x128xf32>
    %38 = tpu.iota {dimensions = array<i32: 0>} : vector<128x128xi32>
    %39 = tpu.iota {dimensions = array<i32: 1>} : vector<128x128xi32>
    %40 = arith.cmpi eq, %38, %39 : vector<128x128xi32>
    %cst_17 = arith.constant 0.000000e+00 : f32
    %41 = vector.broadcast %cst_17 : f32 to vector<128x128xf32>
    %42 = arith.select %40, %37, %41 : vector<128x128xi1>, vector<128x128xf32>
    %cst_18 = arith.constant dense<0.000000e+00> : vector<128xf32>
    %43 = vector.multi_reduction <add>, %42, %cst_18 [0] : vector<128x128xf32> to vector<128xf32>
    %44 = vector.shape_cast %43 : vector<128xf32> to vector<1x128xf32>
    %45 = tpu.iota {dimensions = array<i32: 1>} : vector<1x128xi32>
    %46 = vector.broadcast %0 : i32 to vector<1x128xi32>
    %47 = arith.addi %46, %45 : vector<1x128xi32>
    %c8_i32_19 = arith.constant 8 : i32
    %48 = vector.broadcast %c8_i32_19 : i32 to vector<1x128xi32>
    %49 = arith.cmpi slt, %47, %48 : vector<1x128xi32>
    %50 = math.log %44 : vector<1x128xf32>
    %51 = math.log %36 : vector<1x128xf32>
    %52 = arith.subf %50, %51 : vector<1x128xf32>
    %cst_20 = arith.constant 0.000000e+00 : f32
    %53 = vector.broadcast %cst_20 : f32 to vector<1x128xf32>
    %54 = arith.select %49, %52, %53 : vector<1x128xi1>, vector<1x128xf32>
    %c0_21 = arith.constant 0 : index
    %c0_22 = arith.constant 0 : index
    %55 = vector.load %arg5[%c0_21, %c0_22] : memref<1x128xf32, #tpu.memory_space<vmem>>, vector<1x128xf32>
    tpu.vector_store %arg5[%c0_21, %c0_22], %54 {strides = array<i32>} : memref<1x128xf32, #tpu.memory_space<vmem>>, vector<1x128xf32>,
    return
  }
  func.func @transform_0(%arg0: i32) -> (i32, i32) {
    %c0_i32 = arith.constant 0 : i32
    %c0_i32_0 = arith.constant 0 : i32
    return %arg0, %c0_i32 : i32, i32
  }
  func.func @transform_1(%arg0: i32) -> (i32, i32) {
    %c0_i32 = arith.constant 0 : i32
    %c0_i32_0 = arith.constant 0 : i32
    return %c0_i32, %arg0 : i32, i32
  }
  func.func @transform_2(%arg0: i32) -> (i32, i32) {
    %c0_i32 = arith.constant 0 : i32
    %c0_i32_0 = arith.constant 0 : i32
    return %arg0, %c0_i32 : i32, i32
  }
  func.func @transform_3(%arg0: i32) -> (i32, i32) {
    %c0_i32 = arith.constant 0 : i32
    %c0_i32_0 = arith.constant 0 : i32
    return %arg0, %c0_i32 : i32, i32
  }
  func.func @transform_4(%arg0: i32) -> (i32, i32) {
    %c0_i32 = arith.constant 0 : i32
    %c0_i32_0 = arith.constant 0 : i32
    return %c0_i32, %arg0 : i32, i32
  }
}

</mosaic_0001>

<llo_original>
// kernel: tpu_custom_call.1
$region0: #{tpu_custom_call.1}
  #allocation0 [shape = 'u32[]', space=smem, size = 0x4, offset = 0x4, fixed_abs, tag = 'smem constant byte address 0x4 - core index']
  #allocation1 [shape = 'u32[72,128]{1,0:T(1,128)}', space=vmem, size = 0x9000, scoped, tag = 'internal scratch']
  %s0 = inlined_call_operand.hbm [shape: f32[128,128], index: 0, kind: input, shape index: {}]
  %s1 = inlined_call_operand.hbm [shape: f32[128,128], index: 1, kind: input, shape index: {}]
  %s2 = inlined_call_operand.hbm [shape: s8[128,128], index: 2, kind: input, shape index: {}]
  %s3 = inlined_call_operand.vmem [shape: f32[128,1], index: 3, kind: output, shape index: {0}]
  %s4 = inlined_call_operand.hbm [shape: f32[1,128], index: 4, kind: output, shape index: {1}]
  %5 = xla_tuple %s3, %s4
  %s6 = sld [smem:[#allocation0]]
  $region42: #{tpu_custom_call.1} parent=0
    _
  %s8 = ssub.s32 1, %s6
  %s9 = scalar_select 0, %s8, %s6
  $region1: #{tpu_custom_call.1} parent=0
    #allocation2 [shape = 'u8[65536]{0}', space=vmem, size = 0x10000, scoped, tag = 'input window, operand 0, single buffered']
    #allocation3 [shape = 's32[1]{0}', space=sflag, size = 0x4, scoped, tag = 'scoped memory for tpu_custom_call.1']
    #allocation4 [shape = 's32[1]{0}', space=sflag, size = 0x4, scoped, tag = 'scoped memory for tpu_custom_call.1']
    #allocation5 [shape = 'u8[65536]{0}', space=vmem, size = 0x10000, scoped, tag = 'input window, operand 1, single buffered']
    #allocation6 [shape = 's32[1]{0}', space=sflag, size = 0x4, scoped, tag = 'scoped memory for tpu_custom_call.1']
    #allocation7 [shape = 'u8[16384]{0}', space=vmem, size = 0x4000, scoped, tag = 'input window, operand 2, single buffered']
    #allocation8 [shape = 'u8[512]{0}', space=vmem, size = 0x400, scoped, tag = 'output window, operand 1, single buffered']
    %10 = vsyncpa [#allocation3], 0
    %11 = vsyncpa [#allocation6], 0
    %12 = vsyncpa [#allocation4], 0
    // Predicated region
    $region2: #{tpu_custom_call.1} parent=1 // pred_check
      _
    $region3: #{tpu_custom_call.1} parent=1 // pred_check_branch
      %14 = sbr.rel (0) target = $region5
    $region4: #{tpu_custom_call.1} parent=1 // pred_region
      %16 = vsyncadd [#allocation3], 0
      %s17 = sshll.u32 %s0, 4
      %s18 = int_to_ptr.hbm [resolvable:$true] %s17
      %s19 = sshll.u32 [#allocation2], 4
      %s20 = int_to_ptr.vmem [resolvable:$true] %s19
      %25 = dma.hbm_to_vmem [thread:$0]  %s18, 2048, %s20, [#allocation3], 128, 128, 8
    $region5: #{tpu_custom_call.1} parent=1 // pred_fallthru
      _
    // Predicated region
    $region6: #{tpu_custom_call.1} parent=1 // pred_check
      _
    $region7: #{tpu_custom_call.1} parent=1 // pred_check_branch
      %27 = sbr.rel (0) target = $region9
    $region8: #{tpu_custom_call.1} parent=1 // pred_region
      %29 = vsyncadd [#allocation6], 0
      %s30 = sshll.u32 %s1, 4
      %s31 = int_to_ptr.hbm [resolvable:$true] %s30
      %s32 = sshll.u32 [#allocation5], 4
      %s33 = int_to_ptr.vmem [resolvable:$true] %s32
      %38 = dma.hbm_to_vmem [thread:$0]  %s31, 2048, %s33, [#allocation6], 128, 128, 8
    $region9: #{tpu_custom_call.1} parent=1 // pred_fallthru
      _
    // Predicated region
    $region10: #{tpu_custom_call.1} parent=1 // pred_check
      _
    $region11: #{tpu_custom_call.1} parent=1 // pred_check_branch
      %40 = sbr.rel (0) target = $region13
    $region12: #{tpu_custom_call.1} parent=1 // pred_region
      %42 = vsyncadd [#allocation6], 0
      %s43 = sshll.u32 %s2, 4
      %s44 = int_to_ptr.hbm [resolvable:$true] %s43
      %s45 = sshll.u32 [#allocation7], 4
      %s46 = int_to_ptr.vmem [resolvable:$true] %s45
      %51 = dma.hbm_to_vmem [thread:$0]  %s44, 512, %s46, [#allocation6], 128, 128, 8
    $region13: #{tpu_custom_call.1} parent=1 // pred_fallthru
      _
    // Predicated region
    $region14: #{tpu_custom_call.1} parent=1 // pred_check
      _
    $region15: #{tpu_custom_call.1} parent=1 // pred_check_branch
      %53 = sbr.rel (0) target = $region17
    $region16: #{tpu_custom_call.1} parent=1 // pred_region
      %55 = dma.done [#allocation3], 2048
    $region17: #{tpu_custom_call.1} parent=1 // pred_fallthru
      _
    // Predicated region
    $region18: #{tpu_custom_call.1} parent=1 // pred_check
      _
    $region19: #{tpu_custom_call.1} parent=1 // pred_check_branch
      %57 = sbr.rel (0) target = $region21
    $region20: #{tpu_custom_call.1} parent=1 // pred_region
      %59 = dma.done [#allocation6], 2048
    $region21: #{tpu_custom_call.1} parent=1 // pred_fallthru
      _
    // Predicated region
    $region22: #{tpu_custom_call.1} parent=1 // pred_check
      _
    $region23: #{tpu_custom_call.1} parent=1 // pred_check_branch
      %61 = sbr.rel (0) target = $region25
    $region24: #{tpu_custom_call.1} parent=1 // pred_region
      %63 = dma.done [#allocation6], 512
    $region25: #{tpu_custom_call.1} parent=1 // pred_fallthru
      _
    %s64 = smul.u32 0, 128
    %v65 = vld [vmem:[#allocation7] sm:$0xff]
    %v66 = vld [vmem:[#allocation7 + $0x8] sm:$0xff]
    %v67 = vld [vmem:[#allocation7 + $0x10] sm:$0xff]
    %v68 = vld [vmem:[#allocation7 + $0x18] sm:$0xff]
    %v69 = vunpack.c.0.s8 %v65
    %v70 = vunpack.c.1.s8 %v65
    %v71 = vunpack.c.2.s8 %v65
    %v72 = vunpack.c.3.s8 %v65
    %v73 = vunpack.c.0.s8 %v66
    %v74 = vunpack.c.1.s8 %v66
    %v75 = vunpack.c.2.s8 %v66
    %v76 = vunpack.c.3.s8 %v66
    %v77 = vunpack.c.0.s8 %v67
    %v78 = vunpack.c.1.s8 %v67
    %v79 = vunpack.c.2.s8 %v67
    %v80 = vunpack.c.3.s8 %v67
    %v81 = vunpack.c.0.s8 %v68
    %v82 = vunpack.c.1.s8 %v68
    %v83 = vunpack.c.2.s8 %v68
    %v84 = vunpack.c.3.s8 %v68
    %v85 = vcvt.s32.f32 %v69
    %v86 = vcvt.s32.f32 %v70
    %v87 = vcvt.s32.f32 %v71
    %v88 = vcvt.s32.f32 %v72
    %v89 = vcvt.s32.f32 %v73
    %v90 = vcvt.s32.f32 %v74
    %v91 = vcvt.s32.f32 %v75
    %v92 = vcvt.s32.f32 %v76
    %v93 = vcvt.s32.f32 %v77
    %v94 = vcvt.s32.f32 %v78
    %v95 = vcvt.s32.f32 %v79
    %v96 = vcvt.s32.f32 %v80
    %v97 = vcvt.s32.f32 %v81
    %v98 = vcvt.s32.f32 %v82
    %v99 = vcvt.s32.f32 %v83
    %v100 = vcvt.s32.f32 %v84
    %v101 = vld [vmem:[#allocation2] sm:$0xff]
    %v102 = vld [vmem:[#allocation2 + $0x8] sm:$0xff]
    %v103 = vld [vmem:[#allocation2 + $0x10] sm:$0xff]
    %v104 = vld [vmem:[#allocation2 + $0x18] sm:$0xff]
    %v105 = vld [vmem:[#allocation2 + $0x20] sm:$0xff]
    %v106 = vld [vmem:[#allocation2 + $0x28] sm:$0xff]
    %v107 = vld [vmem:[#allocation2 + $0x30] sm:$0xff]
    %v108 = vld [vmem:[#allocation2 + $0x38] sm:$0xff]
    %v109 = vld [vmem:[#allocation2 + $0x40] sm:$0xff]
    %v110 = vld [vmem:[#allocation2 + $0x48] sm:$0xff]
    %v111 = vld [vmem:[#allocation2 + $0x50] sm:$0xff]
    %v112 = vld [vmem:[#allocation2 + $0x58] sm:$0xff]
    %v113 = vld [vmem:[#allocation2 + $0x60] sm:$0xff]
    %v114 = vld [vmem:[#allocation2 + $0x68] sm:$0xff]
    %v115 = vld [vmem:[#allocation2 + $0x70] sm:$0xff]
    %v116 = vld [vmem:[#allocation2 + $0x78] sm:$0xff]
    %v117 = vmin.f32 %v101, 1.0
    %v118 = vmin.f32 %v102, 1.0
    %v119 = vmin.f32 %v103, 1.0
    %v120 = vmin.f32 %v104, 1.0
    %v121 = vmin.f32 %v105, 1.0
    %v122 = vmin.f32 %v106, 1.0
    %v123 = vmin.f32 %v107, 1.0
    %v124 = vmin.f32 %v108, 1.0
    %v125 = vmin.f32 %v109, 1.0
    %v126 = vmin.f32 %v110, 1.0
    %v127 = vmin.f32 %v111, 1.0
    %v128 = vmin.f32 %v112, 1.0
    %v129 = vmin.f32 %v113, 1.0
    %v130 = vmin.f32 %v114, 1.0
    %v131 = vmin.f32 %v115, 1.0
    %v132 = vmin.f32 %v116, 1.0
    %v133 = vsub.f32 %v117, 1.0
    %v134 = vsub.f32 %v118, 1.0
    %v135 = vsub.f32 %v119, 1.0
    %v136 = vsub.f32 %v120, 1.0
    %v137 = vsub.f32 %v121, 1.0
    %v138 = vsub.f32 %v122, 1.0
    %v139 = vsub.f32 %v123, 1.0
    %v140 = vsub.f32 %v124, 1.0
    %v141 = vsub.f32 %v125, 1.0
    %v142 = vsub.f32 %v126, 1.0
    %v143 = vsub.f32 %v127, 1.0
    %v144 = vsub.f32 %v128, 1.0
    %v145 = vsub.f32 %v129, 1.0
    %v146 = vsub.f32 %v130, 1.0
    %v147 = vsub.f32 %v131, 1.0
    %v148 = vsub.f32 %v132, 1.0
    %v149 = vmul.f32 %v133, 20.0
    %v150 = vmul.f32 %v134, 20.0
    %v151 = vmul.f32 %v135, 20.0
    %v152 = vmul.f32 %v136, 20.0
    %v153 = vmul.f32 %v137, 20.0
    %v154 = vmul.f32 %v138, 20.0
    %v155 = vmul.f32 %v139, 20.0
    %v156 = vmul.f32 %v140, 20.0
    %v157 = vmul.f32 %v141, 20.0
    %v158 = vmul.f32 %v142, 20.0
    %v159 = vmul.f32 %v143, 20.0
    %v160 = vmul.f32 %v144, 20.0
    %v161 = vmul.f32 %v145, 20.0
    %v162 = vmul.f32 %v146, 20.0
    %v163 = vmul.f32 %v147, 20.0
    %v164 = vmul.f32 %v148, 20.0
    %v165 = vmul.f32 %v149, 1.442695
    %v166 = vpow.pop %v165
    %v167 = vmul.f32 %v150, 1.442695
    %v168 = vpow.pop %v167
    %v169 = vmul.f32 %v151, 1.442695
    %v170 = vpow.pop %v169
    %v171 = vmul.f32 %v152, 1.442695
    %v172 = vpow.pop %v171
    %v173 = vmul.f32 %v153, 1.442695
    %v174 = vpow.pop %v173
    %v175 = vmul.f32 %v154, 1.442695
    %v176 = vpow.pop %v175
    %v177 = vmul.f32 %v155, 1.442695
    %v178 = vpow.pop %v177
    %v179 = vmul.f32 %v156, 1.442695
    %v180 = vpow.pop %v179
    %v181 = vmul.f32 %v157, 1.442695
    %v182 = vpow.pop %v181
    %v183 = vmul.f32 %v158, 1.442695
    %v184 = vpow.pop %v183
    %v185 = vmul.f32 %v159, 1.442695
    %v186 = vpow.pop %v185
    %v187 = vmul.f32 %v160, 1.442695
    %v188 = vpow.pop %v187
    %v189 = vmul.f32 %v161, 1.442695
    %v190 = vpow.pop %v189
    %v191 = vmul.f32 %v162, 1.442695
    %v192 = vpow.pop %v191
    %v193 = vmul.f32 %v163, 1.442695
    %v194 = vpow.pop %v193
    %v195 = vmul.f32 %v164, 1.442695
    %v196 = vpow.pop %v195
    %197 = vadd.xlane.f32.xlu0 %v166
    %v198 = vpop.xlane.xlu0 %197
    %199 = vadd.xlane.f32.xlu0 %v168
    %v200 = vpop.xlane.xlu0 %199
    %201 = vadd.xlane.f32.xlu0 %v170
    %v202 = vpop.xlane.xlu0 %201
    %203 = vadd.xlane.f32.xlu0 %v172
    %v204 = vpop.xlane.xlu0 %203
    %205 = vadd.xlane.f32.xlu0 %v174
    %v206 = vpop.xlane.xlu0 %205
    %207 = vadd.xlane.f32.xlu0 %v176
    %v208 = vpop.xlane.xlu0 %207
    %209 = vadd.xlane.f32.xlu0 %v178
    %v210 = vpop.xlane.xlu0 %209
    %211 = vadd.xlane.f32.xlu0 %v180
    %v212 = vpop.xlane.xlu0 %211
    %213 = vadd.xlane.f32.xlu0 %v182
    %v214 = vpop.xlane.xlu0 %213
    %215 = vadd.xlane.f32.xlu0 %v184
    %v216 = vpop.xlane.xlu0 %215
    %217 = vadd.xlane.f32.xlu0 %v186
    %v218 = vpop.xlane.xlu0 %217
    %219 = vadd.xlane.f32.xlu0 %v188
    %v220 = vpop.xlane.xlu0 %219
    %221 = vadd.xlane.f32.xlu0 %v190
    %v222 = vpop.xlane.xlu0 %221
    %223 = vadd.xlane.f32.xlu0 %v192
    %v224 = vpop.xlane.xlu0 %223
    %225 = vadd.xlane.f32.xlu0 %v194
    %v226 = vpop.xlane.xlu0 %225
    %227 = vadd.xlane.f32.xlu0 %v196
    %v228 = vpop.xlane.xlu0 %227
    %v229 = vmul.f32 %v166, %v85
    %v230 = vmul.f32 %v168, %v86
    %v231 = vmul.f32 %v170, %v87
    %v232 = vmul.f32 %v172, %v88
    %v233 = vmul.f32 %v174, %v89
    %v234 = vmul.f32 %v176, %v90
    %v235 = vmul.f32 %v178, %v91
    %v236 = vmul.f32 %v180, %v92
    %v237 = vmul.f32 %v182, %v93
    %v238 = vmul.f32 %v184, %v94
    %v239 = vmul.f32 %v186, %v95
    %v240 = vmul.f32 %v188, %v96
    %v241 = vmul.f32 %v190, %v97
    %v242 = vmul.f32 %v192, %v98
    %v243 = vmul.f32 %v194, %v99
    %v244 = vmul.f32 %v196, %v100
    %245 = vadd.xlane.f32.xlu0 %v229
    %v246 = vpop.xlane.xlu0 %245
    %247 = vadd.xlane.f32.xlu0 %v230
    %v248 = vpop.xlane.xlu0 %247
    %249 = vadd.xlane.f32.xlu0 %v231
    %v250 = vpop.xlane.xlu0 %249
    %251 = vadd.xlane.f32.xlu0 %v232
    %v252 = vpop.xlane.xlu0 %251
    %253 = vadd.xlane.f32.xlu0 %v233
    %v254 = vpop.xlane.xlu0 %253
    %255 = vadd.xlane.f32.xlu0 %v234
    %v256 = vpop.xlane.xlu0 %255
    %257 = vadd.xlane.f32.xlu0 %v235
    %v258 = vpop.xlane.xlu0 %257
    %259 = vadd.xlane.f32.xlu0 %v236
    %v260 = vpop.xlane.xlu0 %259
    %261 = vadd.xlane.f32.xlu0 %v237
    %v262 = vpop.xlane.xlu0 %261
    %263 = vadd.xlane.f32.xlu0 %v238
    %v264 = vpop.xlane.xlu0 %263
    %265 = vadd.xlane.f32.xlu0 %v239
    %v266 = vpop.xlane.xlu0 %265
    %267 = vadd.xlane.f32.xlu0 %v240
    %v268 = vpop.xlane.xlu0 %267
    %269 = vadd.xlane.f32.xlu0 %v241
    %v270 = vpop.xlane.xlu0 %269
    %271 = vadd.xlane.f32.xlu0 %v242
    %v272 = vpop.xlane.xlu0 %271
    %273 = vadd.xlane.f32.xlu0 %v243
    %v274 = vpop.xlane.xlu0 %273
    %275 = vadd.xlane.f32.xlu0 %v244
    %v276 = vpop.xlane.xlu0 %275
    %v277 = vlaneseq
    %v278 = vshrl.u32 %v277, 7
    %v279 = vadd.s32 %v278, 8
    %v280 = vadd.s32 %v278, 16
    %v281 = vadd.s32 %v278, 24
    %v282 = vadd.s32 %v278, 32
    %v283 = vadd.s32 %v278, 40
    %v284 = vadd.s32 %v278, 48
    %v285 = vadd.s32 %v278, 56
    %v286 = vadd.s32 %v278, 64
    %v287 = vadd.s32 %v278, 72
    %v288 = vadd.s32 %v278, 80
    %v289 = vadd.s32 %v278, 88
    %v290 = vadd.s32 %v278, 96
    %v291 = vadd.s32 %v278, 104
    %v292 = vadd.s32 %v278, 112
    %v293 = vadd.s32 %v278, 120
    %v294 = vstv %s64
    %v295 = vadd.s32 %v294, %v278
    %v296 = vadd.s32 %v294, %v279
    %v297 = vadd.s32 %v294, %v280
    %v298 = vadd.s32 %v294, %v281
    %v299 = vadd.s32 %v294, %v282
    %v300 = vadd.s32 %v294, %v283
    %v301 = vadd.s32 %v294, %v284
    %v302 = vadd.s32 %v294, %v285
    %v303 = vadd.s32 %v294, %v286
    %v304 = vadd.s32 %v294, %v287
    %v305 = vadd.s32 %v294, %v288
    %v306 = vadd.s32 %v294, %v289
    %v307 = vadd.s32 %v294, %v290
    %v308 = vadd.s32 %v294, %v291
    %v309 = vadd.s32 %v294, %v292
    %v310 = vadd.s32 %v294, %v293
    %vm311 = vcmp.lt.s32.totalorder %v295, 8
    %vm312 = vcmp.lt.s32.totalorder %v296, 8
    %vm313 = vcmp.lt.s32.totalorder %v297, 8
    %vm314 = vcmp.lt.s32.totalorder %v298, 8
    %vm315 = vcmp.lt.s32.totalorder %v299, 8
    %vm316 = vcmp.lt.s32.totalorder %v300, 8
    %vm317 = vcmp.lt.s32.totalorder %v301, 8
    %vm318 = vcmp.lt.s32.totalorder %v302, 8
    %vm319 = vcmp.lt.s32.totalorder %v303, 8
    %vm320 = vcmp.lt.s32.totalorder %v304, 8
    %vm321 = vcmp.lt.s32.totalorder %v305, 8
    %vm322 = vcmp.lt.s32.totalorder %v306, 8
    %vm323 = vcmp.lt.s32.totalorder %v307, 8
    %vm324 = vcmp.lt.s32.totalorder %v308, 8
    %vm325 = vcmp.lt.s32.totalorder %v309, 8
    %vm326 = vcmp.lt.s32.totalorder %v310, 8
    %v327 = vlog2.pop %v246
    %v328 = vmul.f32 %v327, 0.6931472
    %v329 = vlog2.pop %v248
    %v330 = vmul.f32 %v329, 0.6931472
    %v331 = vlog2.pop %v250
    %v332 = vmul.f32 %v331, 0.6931472
    %v333 = vlog2.pop %v252
    %v334 = vmul.f32 %v333, 0.6931472
    %v335 = vlog2.pop %v254
    %v336 = vmul.f32 %v335, 0.6931472
    %v337 = vlog2.pop %v256
    %v338 = vmul.f32 %v337, 0.6931472
    %v339 = vlog2.pop %v258
    %v340 = vmul.f32 %v339, 0.6931472
    %v341 = vlog2.pop %v260
    %v342 = vmul.f32 %v341, 0.6931472
    %v343 = vlog2.pop %v262
    %v344 = vmul.f32 %v343, 0.6931472
    %v345 = vlog2.pop %v264
    %v346 = vmul.f32 %v345, 0.6931472
    %v347 = vlog2.pop %v266
    %v348 = vmul.f32 %v347, 0.6931472
    %v349 = vlog2.pop %v268
    %v350 = vmul.f32 %v349, 0.6931472
    %v351 = vlog2.pop %v270
    %v352 = vmul.f32 %v351, 0.6931472
    %v353 = vlog2.pop %v272
    %v354 = vmul.f32 %v353, 0.6931472
    %v355 = vlog2.pop %v274
    %v356 = vmul.f32 %v355, 0.6931472
    %v357 = vlog2.pop %v276
    %v358 = vmul.f32 %v357, 0.6931472
    %v359 = vlog2.pop %v198
    %v360 = vmul.f32 %v359, 0.6931472
    %v361 = vlog2.pop %v200
    %v362 = vmul.f32 %v361, 0.6931472
    %v363 = vlog2.pop %v202
    %v364 = vmul.f32 %v363, 0.6931472
    %v365 = vlog2.pop %v204
    %v366 = vmul.f32 %v365, 0.6931472
    %v367 = vlog2.pop %v206
    %v368 = vmul.f32 %v367, 0.6931472
    %v369 = vlog2.pop %v208
    %v370 = vmul.f32 %v369, 0.6931472
    %v371 = vlog2.pop %v210
    %v372 = vmul.f32 %v371, 0.6931472
    %v373 = vlog2.pop %v212
    %v374 = vmul.f32 %v373, 0.6931472
    %v375 = vlog2.pop %v214
    %v376 = vmul.f32 %v375, 0.6931472
    %v377 = vlog2.pop %v216
    %v378 = vmul.f32 %v377, 0.6931472
    %v379 = vlog2.pop %v218
    %v380 = vmul.f32 %v379, 0.6931472
    %v381 = vlog2.pop %v220
    %v382 = vmul.f32 %v381, 0.6931472
    %v383 = vlog2.pop %v222
    %v384 = vmul.f32 %v383, 0.6931472
    %v385 = vlog2.pop %v224
    %v386 = vmul.f32 %v385, 0.6931472
    %v387 = vlog2.pop %v226
    %v388 = vmul.f32 %v387, 0.6931472
    %v389 = vlog2.pop %v228
    %v390 = vmul.f32 %v389, 0.6931472
    %v391 = vsub.f32 %v328, %v360
    %v392 = vsub.f32 %v330, %v362
    %v393 = vsub.f32 %v332, %v364
    %v394 = vsub.f32 %v334, %v366
    %v395 = vsub.f32 %v336, %v368
    %v396 = vsub.f32 %v338, %v370
    %v397 = vsub.f32 %v340, %v372
    %v398 = vsub.f32 %v342, %v374
    %v399 = vsub.f32 %v344, %v376
    %v400 = vsub.f32 %v346, %v378
    %v401 = vsub.f32 %v348, %v380
    %v402 = vsub.f32 %v350, %v382
    %v403 = vsub.f32 %v352, %v384
    %v404 = vsub.f32 %v354, %v386
    %v405 = vsub.f32 %v356, %v388
    %v406 = vsub.f32 %v358, %v390
    %v407 = vsel %vm311, %v391, 0.0
    %v408 = vsel %vm312, %v392, 0.0
    %v409 = vsel %vm313, %v393, 0.0
    %v410 = vsel %vm314, %v394, 0.0
    %v411 = vsel %vm315, %v395, 0.0
    %v412 = vsel %vm316, %v396, 0.0
    %v413 = vsel %vm317, %v397, 0.0
    %v414 = vsel %vm318, %v398, 0.0
    %v415 = vsel %vm319, %v399, 0.0
    %v416 = vsel %vm320, %v400, 0.0
    %v417 = vsel %vm321, %v401, 0.0
    %v418 = vsel %vm322, %v402, 0.0
    %v419 = vsel %vm323, %v403, 0.0
    %v420 = vsel %vm324, %v404, 0.0
    %v421 = vsel %vm325, %v405, 0.0
    %v422 = vsel %vm326, %v406, 0.0
    %vm423 = vcmask 7168
    %424 = vst.msk [vmem:[%s3] sm:$0xff] %vm423, %v407
    %425 = vst.msk [vmem:[%s3 + $0x8] sm:$0xff] %vm423, %v408
    %426 = vst.msk [vmem:[%s3 + $0x10] sm:$0xff] %vm423, %v409
    %427 = vst.msk [vmem:[%s3 + $0x18] sm:$0xff] %vm423, %v410
    %428 = vst.msk [vmem:[%s3 + $0x20] sm:$0xff] %vm423, %v411
    %429 = vst.msk [vmem:[%s3 + $0x28] sm:$0xff] %vm423, %v412
    %430 = vst.msk [vmem:[%s3 + $0x30] sm:$0xff] %vm423, %v413
    %431 = vst.msk [vmem:[%s3 + $0x38] sm:$0xff] %vm423, %v414
    %432 = vst.msk [vmem:[%s3 + $0x40] sm:$0xff] %vm423, %v415
    %433 = vst.msk [vmem:[%s3 + $0x48] sm:$0xff] %vm423, %v416
    %434 = vst.msk [vmem:[%s3 + $0x50] sm:$0xff] %vm423, %v417
    %435 = vst.msk [vmem:[%s3 + $0x58] sm:$0xff] %vm423, %v418
    %436 = vst.msk [vmem:[%s3 + $0x60] sm:$0xff] %vm423, %v419
    %437 = vst.msk [vmem:[%s3 + $0x68] sm:$0xff] %vm423, %v420
    %438 = vst.msk [vmem:[%s3 + $0x70] sm:$0xff] %vm423, %v421
    %439 = vst.msk [vmem:[%s3 + $0x78] sm:$0xff] %vm423, %v422
    %v440 = vld [vmem:[#allocation5] sm:$0xff]
    %v441 = vld [vmem:[#allocation5 + $0x8] sm:$0xff]
    %v442 = vld [vmem:[#allocation5 + $0x10] sm:$0xff]
    %v443 = vld [vmem:[#allocation5 + $0x18] sm:$0xff]
    %v444 = vld [vmem:[#allocation5 + $0x20] sm:$0xff]
    %v445 = vld [vmem:[#allocation5 + $0x28] sm:$0xff]
    %v446 = vld [vmem:[#allocation5 + $0x30] sm:$0xff]
    %v447 = vld [vmem:[#allocation5 + $0x38] sm:$0xff]
    %v448 = vld [vmem:[#allocation5 + $0x40] sm:$0xff]
    %v449 = vld [vmem:[#allocation5 + $0x48] sm:$0xff]
    %v450 = vld [vmem:[#allocation5 + $0x50] sm:$0xff]
    %v451 = vld [vmem:[#allocation5 + $0x58] sm:$0xff]
    %v452 = vld [vmem:[#allocation5 + $0x60] sm:$0xff]
    %v453 = vld [vmem:[#allocation5 + $0x68] sm:$0xff]
    %v454 = vld [vmem:[#allocation5 + $0x70] sm:$0xff]
    %v455 = vld [vmem:[#allocation5 + $0x78] sm:$0xff]
    %v456 = vmin.f32 %v440, 1.0
    %v457 = vmin.f32 %v441, 1.0
    %v458 = vmin.f32 %v442, 1.0
    %v459 = vmin.f32 %v443, 1.0
    %v460 = vmin.f32 %v444, 1.0
    %v461 = vmin.f32 %v445, 1.0
    %v462 = vmin.f32 %v446, 1.0
    %v463 = vmin.f32 %v447, 1.0
    %v464 = vmin.f32 %v448, 1.0
    %v465 = vmin.f32 %v449, 1.0
    %v466 = vmin.f32 %v450, 1.0
    %v467 = vmin.f32 %v451, 1.0
    %v468 = vmin.f32 %v452, 1.0
    %v469 = vmin.f32 %v453, 1.0
    %v470 = vmin.f32 %v454, 1.0
    %v471 = vmin.f32 %v455, 1.0
    %v472 = vsub.f32 %v456, 1.0
    %v473 = vsub.f32 %v457, 1.0
    %v474 = vsub.f32 %v458, 1.0
    %v475 = vsub.f32 %v459, 1.0
    %v476 = vsub.f32 %v460, 1.0
    %v477 = vsub.f32 %v461, 1.0
    %v478 = vsub.f32 %v462, 1.0
    %v479 = vsub.f32 %v463, 1.0
    %v480 = vsub.f32 %v464, 1.0
    %v481 = vsub.f32 %v465, 1.0
    %v482 = vsub.f32 %v466, 1.0
    %v483 = vsub.f32 %v467, 1.0
    %v484 = vsub.f32 %v468, 1.0
    %v485 = vsub.f32 %v469, 1.0
    %v486 = vsub.f32 %v470, 1.0
    %v487 = vsub.f32 %v471, 1.0
    %v488 = vmul.f32 %v472, 20.0
    %v489 = vmul.f32 %v473, 20.0
    %v490 = vmul.f32 %v474, 20.0
    %v491 = vmul.f32 %v475, 20.0
    %v492 = vmul.f32 %v476, 20.0
    %v493 = vmul.f32 %v477, 20.0
    %v494 = vmul.f32 %v478, 20.0
    %v495 = vmul.f32 %v479, 20.0
    %v496 = vmul.f32 %v480, 20.0
    %v497 = vmul.f32 %v481, 20.0
    %v498 = vmul.f32 %v482, 20.0
    %v499 = vmul.f32 %v483, 20.0
    %v500 = vmul.f32 %v484, 20.0
    %v501 = vmul.f32 %v485, 20.0
    %v502 = vmul.f32 %v486, 20.0
    %v503 = vmul.f32 %v487, 20.0
    %v504 = vmul.f32 %v488, 1.442695
    %v505 = vpow.pop %v504
    %v506 = vmul.f32 %v489, 1.442695
    %v507 = vpow.pop %v506
    %v508 = vmul.f32 %v490, 1.442695
    %v509 = vpow.pop %v508
    %v510 = vmul.f32 %v491, 1.442695
    %v511 = vpow.pop %v510
    %v512 = vmul.f32 %v492, 1.442695
    %v513 = vpow.pop %v512
    %v514 = vmul.f32 %v493, 1.442695
    %v515 = vpow.pop %v514
    %v516 = vmul.f32 %v494, 1.442695
    %v517 = vpow.pop %v516
    %v518 = vmul.f32 %v495, 1.442695
    %v519 = vpow.pop %v518
    %v520 = vmul.f32 %v496, 1.442695
    %v521 = vpow.pop %v520
    %v522 = vmul.f32 %v497, 1.442695
    %v523 = vpow.pop %v522
    %v524 = vmul.f32 %v498, 1.442695
    %v525 = vpow.pop %v524
    %v526 = vmul.f32 %v499, 1.442695
    %v527 = vpow.pop %v526
    %v528 = vmul.f32 %v500, 1.442695
    %v529 = vpow.pop %v528
    %v530 = vmul.f32 %v501, 1.442695
    %v531 = vpow.pop %v530
    %v532 = vmul.f32 %v502, 1.442695
    %v533 = vpow.pop %v532
    %v534 = vmul.f32 %v503, 1.442695
    %v535 = vpow.pop %v534
    %v536 = vadd.f32 %v505, %v507
    %v537 = vadd.f32 %v536, %v509
    %v538 = vadd.f32 %v537, %v511
    %v539 = vadd.f32 %v538, %v513
    %v540 = vadd.f32 %v539, %v515
    %v541 = vadd.f32 %v540, %v517
    %v542 = vadd.f32 %v541, %v519
    %v543 = vadd.f32 %v542, %v521
    %v544 = vadd.f32 %v543, %v523
    %v545 = vadd.f32 %v544, %v525
    %v546 = vadd.f32 %v545, %v527
    %v547 = vadd.f32 %v546, %v529
    %v548 = vadd.f32 %v547, %v531
    %v549 = vadd.f32 %v548, %v533
    %v550 = vadd.f32 %v549, %v535
    %v551 = vrot.slane %v550, 4
    %v552 = vadd.f32 %v550, %v551
    %v553 = vrot.slane %v552, 2
    %v554 = vadd.f32 %v552, %v553
    %v555 = vrot.slane %v554, 1
    %v556 = vadd.f32 %v554, %v555
    %557 = vmatpush.msra.mxu0 %v535
    %558 = vmatpush.msra.mxu0 %v533
    %559 = vmatpush.msra.mxu0 %v531
    %560 = vmatpush.msra.mxu0 %v529
    %561 = vmatpush.msra.mxu0 %v527
    %562 = vmatpush.msra.mxu0 %v525
    %563 = vmatpush.msra.mxu0 %v523
    %564 = vmatpush.msra.mxu0 %v521
    %565 = vmatpush.msra.mxu0 %v519
    %566 = vmatpush.msra.mxu0 %v517
    %567 = vmatpush.msra.mxu0 %v515
    %568 = vmatpush.msra.mxu0 %v513
    %569 = vmatpush.msra.mxu0 %v511
    %570 = vmatpush.msra.mxu0 %v509
    %571 = vmatpush.msra.mxu0 %v507
    %572 = vmatpush.msra.mxu0 %v505
    %573 = vmatmul.f32.gmra.mxu0 %v85
    %v574 = vpop.f32.mrf.mxu0
    %v575 = vadd.f32 0.0, %v574
    %576 = vmatmul.f32.gmra.mxu0 %v86
    %v577 = vpop.f32.mrf.mxu0
    %v578 = vadd.f32 0.0, %v577
    %579 = vmatmul.f32.gmra.mxu0 %v87
    %v580 = vpop.f32.mrf.mxu0
    %v581 = vadd.f32 0.0, %v580
    %582 = vmatmul.f32.gmra.mxu0 %v88
    %v583 = vpop.f32.mrf.mxu0
    %v584 = vadd.f32 0.0, %v583
    %585 = vmatmul.f32.gmra.mxu0 %v89
    %v586 = vpop.f32.mrf.mxu0
    %v587 = vadd.f32 0.0, %v586
    %588 = vmatmul.f32.gmra.mxu0 %v90
    %v589 = vpop.f32.mrf.mxu0
    %v590 = vadd.f32 0.0, %v589
    %591 = vmatmul.f32.gmra.mxu0 %v91
    %v592 = vpop.f32.mrf.mxu0
    %v593 = vadd.f32 0.0, %v592
    %594 = vmatmul.f32.gmra.mxu0 %v92
    %v595 = vpop.f32.mrf.mxu0
    %v596 = vadd.f32 0.0, %v595
    %597 = vmatmul.f32.gmra.mxu0 %v93
    %v598 = vpop.f32.mrf.mxu0
    %v599 = vadd.f32 0.0, %v598
    %600 = vmatmul.f32.gmra.mxu0 %v94
    %v601 = vpop.f32.mrf.mxu0
    %v602 = vadd.f32 0.0, %v601
    %603 = vmatmul.f32.gmra.mxu0 %v95
    %v604 = vpop.f32.mrf.mxu0
    %v605 = vadd.f32 0.0, %v604
    %606 = vmatmul.f32.gmra.mxu0 %v96
    %v607 = vpop.f32.mrf.mxu0
    %v608 = vadd.f32 0.0, %v607
    %609 = vmatmul.f32.gmra.mxu0 %v97
    %v610 = vpop.f32.mrf.mxu0
    %v611 = vadd.f32 0.0, %v610
    %612 = vmatmul.f32.gmra.mxu0 %v98
    %v613 = vpop.f32.mrf.mxu0
    %v614 = vadd.f32 0.0, %v613
    %615 = vmatmul.f32.gmra.mxu0 %v99
    %v616 = vpop.f32.mrf.mxu0
    %v617 = vadd.f32 0.0, %v616
    %618 = vmatmul.f32.gmra.mxu0 %v100
    %v619 = vpop.f32.mrf.mxu0
    %v620 = vadd.f32 0.0, %v619
    %621 = vdwg.mxu0
    %v622 = vlaneseq
    %v623 = vand.u32 %v622, 127
    %vm624 = vcmp.eq.s32.totalorder %v278, %v623
    %vm625 = vcmp.eq.s32.totalorder %v279, %v623
    %vm626 = vcmp.eq.s32.totalorder %v280, %v623
    %vm627 = vcmp.eq.s32.totalorder %v281, %v623
    %vm628 = vcmp.eq.s32.totalorder %v282, %v623
    %vm629 = vcmp.eq.s32.totalorder %v283, %v623
    %vm630 = vcmp.eq.s32.totalorder %v284, %v623
    %vm631 = vcmp.eq.s32.totalorder %v285, %v623
    %vm632 = vcmp.eq.s32.totalorder %v286, %v623
    %vm633 = vcmp.eq.s32.totalorder %v287, %v623
    %vm634 = vcmp.eq.s32.totalorder %v288, %v623
    %vm635 = vcmp.eq.s32.totalorder %v289, %v623
    %vm636 = vcmp.eq.s32.totalorder %v290, %v623
    %vm637 = vcmp.eq.s32.totalorder %v291, %v623
    %vm638 = vcmp.eq.s32.totalorder %v292, %v623
    %vm639 = vcmp.eq.s32.totalorder %v293, %v623
    %v640 = vsel %vm624, %v575, 0.0
    %v641 = vsel %vm625, %v578, 0.0
    %v642 = vsel %vm626, %v581, 0.0
    %v643 = vsel %vm627, %v584, 0.0
    %v644 = vsel %vm628, %v587, 0.0
    %v645 = vsel %vm629, %v590, 0.0
    %v646 = vsel %vm630, %v593, 0.0
    %v647 = vsel %vm631, %v596, 0.0
    %v648 = vsel %vm632, %v599, 0.0
    %v649 = vsel %vm633, %v602, 0.0
    %v650 = vsel %vm634, %v605, 0.0
    %v651 = vsel %vm635, %v608, 0.0
    %v652 = vsel %vm636, %v611, 0.0
    %v653 = vsel %vm637, %v614, 0.0
    %v654 = vsel %vm638, %v617, 0.0
    %v655 = vsel %vm639, %v620, 0.0
    %v656 = vadd.f32 %v640, %v641
    %v657 = vadd.f32 %v656, %v642
    %v658 = vadd.f32 %v657, %v643
    %v659 = vadd.f32 %v658, %v644
    %v660 = vadd.f32 %v659, %v645
    %v661 = vadd.f32 %v660, %v646
    %v662 = vadd.f32 %v661, %v647
    %v663 = vadd.f32 %v662, %v648
    %v664 = vadd.f32 %v663, %v649
    %v665 = vadd.f32 %v664, %v650
    %v666 = vadd.f32 %v665, %v651
    %v667 = vadd.f32 %v666, %v652
    %v668 = vadd.f32 %v667, %v653
    %v669 = vadd.f32 %v668, %v654
    %v670 = vadd.f32 %v669, %v655
    %v671 = vrot.slane %v670, 4
    %v672 = vadd.f32 %v670, %v671
    %v673 = vrot.slane %v672, 2
    %v674 = vadd.f32 %v672, %v673
    %v675 = vrot.slane %v674, 1
    %v676 = vadd.f32 %v674, %v675
    %v677 = vadd.s32 %v294, %v623
    %vm678 = vcmp.lt.s32.totalorder %v677, 8
    %v679 = vlog2.pop %v676
    %v680 = vmul.f32 %v679, 0.6931472
    %v681 = vlog2.pop %v556
    %v682 = vmul.f32 %v681, 0.6931472
    %v683 = vsub.f32 %v680, %v682
    %v684 = vsel %vm678, %v683, 0.0
    %685 = vst [vmem:[#allocation8] sm:$0x1] %v684
    // Predicated region
    $region26: #{tpu_custom_call.1} parent=1 // pred_check
      _
    $region27: #{tpu_custom_call.1} parent=1 // pred_check_branch
      %687 = sbr.rel (0) target = $region29
    $region28: #{tpu_custom_call.1} parent=1 // pred_region
      _
    $region29: #{tpu_custom_call.1} parent=1 // pred_fallthru
      _
    // Predicated region
    $region30: #{tpu_custom_call.1} parent=1 // pred_check
      _
    $region31: #{tpu_custom_call.1} parent=1 // pred_check_branch
      %689 = sbr.rel (0) target = $region33
    $region32: #{tpu_custom_call.1} parent=1 // pred_region
      %691 = vsyncadd [#allocation4], 0
      %s693 = sshll.u32 [#allocation8], 4
      %s694 = int_to_ptr.vmem [resolvable:$true] %s693
      %s695 = sshll.u32 %s4, 4
      %s696 = int_to_ptr.hbm [resolvable:$true] %s695
      %698 = dma.vmem_to_hbm [thread:$0]  %s694, 16, %s696, [#allocation4]
    $region33: #{tpu_custom_call.1} parent=1 // pred_fallthru
      _
    // Predicated region
    $region34: #{tpu_custom_call.1} parent=1 // pred_check
      _
    $region35: #{tpu_custom_call.1} parent=1 // pred_check_branch
      %700 = sbr.rel (0) target = $region37
    $region36: #{tpu_custom_call.1} parent=1 // pred_region
      _
    $region37: #{tpu_custom_call.1} parent=1 // pred_fallthru
      _
    // Predicated region
    $region38: #{tpu_custom_call.1} parent=1 // pred_check
      _
    $region39: #{tpu_custom_call.1} parent=1 // pred_check_branch
      %702 = sbr.rel (0) target = $region41
    $region40: #{tpu_custom_call.1} parent=1 // pred_region
      %704 = dma.done [#allocation4], 16
    $region41: #{tpu_custom_call.1} parent=1 // pred_fallthru
      _
    %705 = vsyncpa [#allocation3], 1
    %706 = vsyncpa [#allocation6], 1
    %707 = vsyncpa [#allocation4], 1

</llo_original>
